<compile_context>
chip_gen: v6e
topology: v6e:2x2x1
jax: 0.10.0
libtpu: 0.0.40
codegen_flags: <defaults>
</compile_context>

<pallas_src>
import functools

import jax
import jax.numpy as jnp
from jax.experimental import pallas as pl
from jax.experimental.pallas import tpu as pltpu

EPS = 1e-5  # PyTorch InstanceNorm2d default eps


# ------------------------------ Pallas kernel -------------------------------

def _conv_in_relu_kernel(x_ref, w_ref, b_ref, m_ref, o_ref, xcol_ref, *,
                         offsets, cin_p, l_out, inv_n):
    """Fused Conv2d(3x3) + bias + InstanceNorm2d + ReLU for one batch element.

    x_ref    : (1, cin_p, FLAT)   padded input; channels on sublanes, flat
                                  padded spatial on lanes (f32)
    w_ref    : (Cout, KK*cin_p)   conv weights, tap-major / channel-minor (bf16)
    b_ref    : (Cout, 1)          conv bias (f32)
    m_ref    : (1, l_out)         1.0 on valid spatial lanes, 0.0 on the
                                  padded-width garbage columns (f32)
    o_ref    : (1, Cout, l_out)   output (f32)
    xcol_ref : (KK*cin_p, l_out)  VMEM scratch for the in-VMEM im2col matrix
    """
    # 1) Build im2col in VMEM scratch (never materialized in HBM): block k of
    #    rows holds the input window shifted by tap offset k (static slices).
    for k, off in enumerate(offsets):
        xcol_ref[k * cin_p:(k + 1) * cin_p, :] = x_ref[0, :, off:off + l_out]

    # 2) Single lane-dense MXU matmul over the fused (tap x Cin) contraction:
    #    bf16 operands, f32 accumulation.
    y = jnp.dot(w_ref[...], xcol_ref[...].astype(jnp.bfloat16),
                preferred_element_type=jnp.float32)            # (Cout, l_out)
    y = y + b_ref[...]                                         # conv bias

    # 3) InstanceNorm2d over the valid spatial lanes (biased variance,
    #    one pass: E[x^2] - mean^2) + ReLU.
    mask = m_ref[...]                                          # (1, l_out)
    ym = y * mask
    s1 = jnp.sum(ym, axis=1, keepdims=True)                    # (Cout, 1)
    s2 = jnp.sum(ym * ym, axis=1, keepdims=True)
    mean = s1 * inv_n
    var = s2 * inv_n - mean * mean
    o_ref[0] = jnp.maximum((y - mean) * jax.lax.rsqrt(var + EPS), 0.0)


# ------------------------------- host wrapper --------------------------------

def conv_block_my_forward(x_nchw, weight, bias, *,
                          kernel_size=3, padding=1, dilation=1):
    """x: (B, Cin, H, W) f32, weight: (Cout, Cin, K, K), bias: (Cout,).

    Stride-1 conv; returns (B, Cout, H_out, W_out) f32 (NCHW), matching
    Conv2d + InstanceNorm2d + ReLU of the PyTorch module.
    """
    B, Cin, H, W = x_nchw.shape
    Cout = weight.shape[0]
    K, d, p = kernel_size, dilation, padding

    H_out = H + 2 * p - d * (K - 1)
    W_out = W + 2 * p - d * (K - 1)
    Hp, Wp = H + 2 * p, W + 2 * p
    CIN_P = ((Cin + 7) // 8) * 8            # pad channels to f32 sublane tile
    KK = K * K
    L = H_out * Wp                          # lane extent of the output block
    tail = d * (K - 1)                      # extra flat padding so every tap
    FLAT = Hp * Wp + tail                   # slice [off : off+L] stays in range

    # ---- glue (cheap XLA ops, all ~1x HBM traffic) ----
    x = x_nchw.astype(jnp.float32)
    xpad = jnp.pad(x, ((0, 0), (0, CIN_P - Cin), (p, p), (p, p)))
    xflat = jnp.pad(xpad.reshape(B, CIN_P, Hp * Wp), ((0, 0), (0, 0), (0, tail)))

    # weight (Cout, Cin, K, K) -> (Cout, KK*CIN_P), tap-major / channel-minor
    wp = jnp.pad(weight.astype(jnp.float32),
                 ((0, 0), (0, CIN_P - Cin), (0, 0), (0, 0)))
    wmat = jnp.transpose(wp, (0, 2, 3, 1)).reshape(Cout, KK * CIN_P)
    wmat = wmat.astype(jnp.bfloat16)
    bcol = bias.astype(jnp.float32).reshape(Cout, 1)

    # valid-lane mask: lane q is a real output iff (q mod Wp) < W_out
    lane = jnp.arange(L, dtype=jnp.int32)
    mask = ((lane % Wp) < W_out).astype(jnp.float32).reshape(1, L)

    # tap offsets in the flattened padded spatial layout (static Python ints)
    offsets = tuple((kh * d) * Wp + kw * d for kh in range(K) for kw in range(K))

    kern = functools.partial(_conv_in_relu_kernel,
                             offsets=offsets, cin_p=CIN_P, l_out=L,
                             inv_n=1.0 / float(H_out * W_out))

    flops = 2 * B * Cout * (KK * CIN_P) * L + 10 * B * Cout * L
    bytes_accessed = (xflat.size * 4 + wmat.size * 2 + bcol.size * 4
                      + mask.size * 4 + B * Cout * L * 4)

    y = pl.pallas_call(
        kern,
        out_shape=jax.ShapeDtypeStruct((B, Cout, L), jnp.float32),
        grid=(B,),
        in_specs=[
            pl.BlockSpec((1, CIN_P, FLAT), lambda b: (b, 0, 0)),   # input
            pl.BlockSpec((Cout, KK * CIN_P), lambda b: (0, 0)),    # weights
            pl.BlockSpec((Cout, 1), lambda b: (0, 0)),             # bias
            pl.BlockSpec((1, L), lambda b: (0, 0)),                # valid mask
        ],
        out_specs=pl.BlockSpec((1, Cout, L), lambda b: (b, 0, 0)),
        scratch_shapes=[pltpu.VMEM((KK * CIN_P, L), jnp.float32)],  # im2col
        compiler_params=pltpu.CompilerParams(
            dimension_semantics=("parallel",)),
        cost_estimate=pl.CostEstimate(flops=int(flops),
                                      transcendentals=int(B * Cout),
                                      bytes_accessed=int(bytes_accessed)),
    )(xflat, wmat, bcol, mask)

    # drop the padded-width garbage columns; result is already NCHW
    return y.reshape(B, Cout, H_out, Wp)[:, :, :, :W_out]


# ------------------------------ pure-JAX reference ---------------------------

def _reference(x, w, b):
    y = jax.lax.conv_general_dilated(
        x, w, window_strides=(1, 1), padding=((1, 1), (1, 1)),
        rhs_dilation=(1, 1),
        dimension_numbers=("NCHW", "OIHW", "NCHW"))
    y = y + b.reshape(1, -1, 1, 1)
    mean = jnp.mean(y, axis=(2, 3), keepdims=True)
    var = jnp.mean(jnp.square(y - mean), axis=(2, 3), keepdims=True)
    return jnp.maximum((y - mean) * jax.lax.rsqrt(var + EPS), 0.0)


# ------------------------------------ main ------------------------------------

if __name__ == "__main__":
    key = jax.random.PRNGKey(0)
    kx, kw, kb = jax.random.split(key, 3)

    B, Cin, Cout, H, W, K = 2, 4, 4, 16, 16, 3
    x = jax.random.normal(kx, (B, Cin, H, W), jnp.float32)

    # PyTorch Conv2d default (kaiming-uniform) style init
    fan_in = Cin * K * K
    bound = 1.0 / (fan_in ** 0.5)
    w = jax.random.uniform(kw, (Cout, Cin, K, K), jnp.float32, -bound, bound)
    b = jax.random.uniform(kb, (Cout,), jnp.float32, -bound, bound)

    fwd = jax.jit(functools.partial(conv_block_my_forward,
                                    kernel_size=K, padding=1, dilation=1))
    out = fwd(x, w, b)
    jax.block_until_ready(out)

    assert out.shape == (B, Cout, H, W), out.shape
    assert bool(jnp.all(jnp.isfinite(out)))

    ref = _reference(x, w, b)
    # bf16 MXU operands vs f32 reference -> small numerical difference
    assert bool(jnp.allclose(out, ref, atol=5e-2, rtol=5e-2)), \
        float(jnp.max(jnp.abs(out - ref)))

    print("KERNEL_OK")
</pallas_src>

<mosaic_0001>
module attributes {stable_mosaic.version = 11 : i64} {
  func.func @_conv_in_relu_kernel(%arg0: i32, %arg1: memref<1x8x326xf32, #tpu.memory_space<vmem>>, %arg2: memref<4x72xbf16, #tpu.memory_space<vmem>>, %arg3: memref<4x1xf32, #tpu.memory_space<vmem>>, %arg4: memref<1x288xf32, #tpu.memory_space<vmem>>, %arg5: memref<1x4x288xf32, #tpu.memory_space<vmem>>, %arg6: memref<72x288xf32, #tpu.memory_space<vmem>>) attributes {dimension_semantics = [#tpu.dimension_semantics<parallel>], iteration_bounds = array<i64: 2>, scalar_prefetch = 0 : i64, scratch_operands = 1 : i64, tpu.core_type = #tpu.core_type<tc>, window_params = [{transform_indices = @transform_0, window_bounds = array<i64: 1, 8, 326>}, {pipeline_mode = #tpu.pipeline_mode<synchronous>, transform_indices = @transform_1, window_bounds = array<i64: 4, 72>}, {pipeline_mode = #tpu.pipeline_mode<synchronous>, transform_indices = @transform_2, window_bounds = array<i64: 4, 1>}, {pipeline_mode = #tpu.pipeline_mode<synchronous>, transform_indices = @transform_3, window_bounds = array<i64: 1, 288>}, {transform_indices = @transform_4, window_bounds = array<i64: 1, 4, 288>}]} {
    %c0 = arith.constant 0 : index
    %c0_0 = arith.constant 0 : index
    %c0_1 = arith.constant 0 : index
    %0 = vector.load %arg1[%c0, %c0_0, %c0_1] : memref<1x8x326xf32, #tpu.memory_space<vmem>>, vector<1x8x288xf32>
    %1 = vector.shape_cast %0 : vector<1x8x288xf32> to vector<8x288xf32>
    %c0_2 = arith.constant 0 : index
    %c0_3 = arith.constant 0 : index
    %2 = vector.load %arg6[%c0_2, %c0_3] : memref<72x288xf32, #tpu.memory_space<vmem>>, vector<8x288xf32>
    tpu.vector_store %arg6[%c0_2, %c0_3], %1 {strides = array<i32>} : memref<72x288xf32, #tpu.memory_space<vmem>>, vector<8x288xf32>,
    %c0_4 = arith.constant 0 : index
    %c0_5 = arith.constant 0 : index
    %c1 = arith.constant 1 : index
    %3 = vector.load %arg1[%c0_4, %c0_5, %c1] : memref<1x8x326xf32, #tpu.memory_space<vmem>>, vector<1x8x288xf32>
    %4 = vector.shape_cast %3 : vector<1x8x288xf32> to vector<8x288xf32>
    %c8 = arith.constant 8 : index
    %c0_6 = arith.constant 0 : index
    %5 = vector.load %arg6[%c8, %c0_6] : memref<72x288xf32, #tpu.memory_space<vmem>>, vector<8x288xf32>
    tpu.vector_store %arg6[%c8, %c0_6], %4 {strides = array<i32>} : memref<72x288xf32, #tpu.memory_space<vmem>>, vector<8x288xf32>,
    %c0_7 = arith.constant 0 : index
    %c0_8 = arith.constant 0 : index
    %c2 = arith.constant 2 : index
    %6 = vector.load %arg1[%c0_7, %c0_8, %c2] : memref<1x8x326xf32, #tpu.memory_space<vmem>>, vector<1x8x288xf32>
    %7 = vector.shape_cast %6 : vector<1x8x288xf32> to vector<8x288xf32>
    %c16 = arith.constant 16 : index
    %c0_9 = arith.constant 0 : index
    %8 = vector.load %arg6[%c16, %c0_9] : memref<72x288xf32, #tpu.memory_space<vmem>>, vector<8x288xf32>
    tpu.vector_store %arg6[%c16, %c0_9], %7 {strides = array<i32>} : memref<72x288xf32, #tpu.memory_space<vmem>>, vector<8x288xf32>,
    %c0_10 = arith.constant 0 : index
    %c0_11 = arith.constant 0 : index
    %c18 = arith.constant 18 : index
    %9 = vector.load %arg1[%c0_10, %c0_11, %c18] : memref<1x8x326xf32, #tpu.memory_space<vmem>>, vector<1x8x288xf32>
    %10 = vector.shape_cast %9 : vector<1x8x288xf32> to vector<8x288xf32>
    %c24 = arith.constant 24 : index
    %c0_12 = arith.constant 0 : index
    %11 = vector.load %arg6[%c24, %c0_12] : memref<72x288xf32, #tpu.memory_space<vmem>>, vector<8x288xf32>
    tpu.vector_store %arg6[%c24, %c0_12], %10 {strides = array<i32>} : memref<72x288xf32, #tpu.memory_space<vmem>>, vector<8x288xf32>,
    %c0_13 = arith.constant 0 : index
    %c0_14 = arith.constant 0 : index
    %c19 = arith.constant 19 : index
    %12 = vector.load %arg1[%c0_13, %c0_14, %c19] : memref<1x8x326xf32, #tpu.memory_space<vmem>>, vector<1x8x288xf32>
    %13 = vector.shape_cast %12 : vector<1x8x288xf32> to vector<8x288xf32>
    %c32 = arith.constant 32 : index
    %c0_15 = arith.constant 0 : index
    %14 = vector.load %arg6[%c32, %c0_15] : memref<72x288xf32, #tpu.memory_space<vmem>>, vector<8x288xf32>
    tpu.vector_store %arg6[%c32, %c0_15], %13 {strides = array<i32>} : memref<72x288xf32, #tpu.memory_space<vmem>>, vector<8x288xf32>,
    %c0_16 = arith.constant 0 : index
    %c0_17 = arith.constant 0 : index
    %c20 = arith.constant 20 : index
    %15 = vector.load %arg1[%c0_16, %c0_17, %c20] : memref<1x8x326xf32, #tpu.memory_space<vmem>>, vector<1x8x288xf32>
    %16 = vector.shape_cast %15 : vector<1x8x288xf32> to vector<8x288xf32>
    %c40 = arith.constant 40 : index
    %c0_18 = arith.constant 0 : index
    %17 = vector.load %arg6[%c40, %c0_18] : memref<72x288xf32, #tpu.memory_space<vmem>>, vector<8x288xf32>
    tpu.vector_store %arg6[%c40, %c0_18], %16 {strides = array<i32>} : memref<72x288xf32, #tpu.memory_space<vmem>>, vector<8x288xf32>,
    %c0_19 = arith.constant 0 : index
    %c0_20 = arith.constant 0 : index
    %c36 = arith.constant 36 : index
    %18 = vector.load %arg1[%c0_19, %c0_20, %c36] : memref<1x8x326xf32, #tpu.memory_space<vmem>>, vector<1x8x288xf32>
    %19 = vector.shape_cast %18 : vector<1x8x288xf32> to vector<8x288xf32>
    %c48 = arith.constant 48 : index
    %c0_21 = arith.constant 0 : index
    %20 = vector.load %arg6[%c48, %c0_21] : memref<72x288xf32, #tpu.memory_space<vmem>>, vector<8x288xf32>
    tpu.vector_store %arg6[%c48, %c0_21], %19 {strides = array<i32>} : memref<72x288xf32, #tpu.memory_space<vmem>>, vector<8x288xf32>,
    %c0_22 = arith.constant 0 : index
    %c0_23 = arith.constant 0 : index
    %c37 = arith.constant 37 : index
    %21 = vector.load %arg1[%c0_22, %c0_23, %c37] : memref<1x8x326xf32, #tpu.memory_space<vmem>>, vector<1x8x288xf32>
    %22 = vector.shape_cast %21 : vector<1x8x288xf32> to vector<8x288xf32>
    %c56 = arith.constant 56 : index
    %c0_24 = arith.constant 0 : index
    %23 = vector.load %arg6[%c56, %c0_24] : memref<72x288xf32, #tpu.memory_space<vmem>>, vector<8x288xf32>
    tpu.vector_store %arg6[%c56, %c0_24], %22 {strides = array<i32>} : memref<72x288xf32, #tpu.memory_space<vmem>>, vector<8x288xf32>,
    %c0_25 = arith.constant 0 : index
    %c0_26 = arith.constant 0 : index
    %c38 = arith.constant 38 : index
    %24 = vector.load %arg1[%c0_25, %c0_26, %c38] : memref<1x8x326xf32, #tpu.memory_space<vmem>>, vector<1x8x288xf32>
    %25 = vector.shape_cast %24 : vector<1x8x288xf32> to vector<8x288xf32>
    %c64 = arith.constant 64 : index
    %c0_27 = arith.constant 0 : index
    %26 = vector.load %arg6[%c64, %c0_27] : memref<72x288xf32, #tpu.memory_space<vmem>>, vector<8x288xf32>
    tpu.vector_store %arg6[%c64, %c0_27], %25 {strides = array<i32>} : memref<72x288xf32, #tpu.memory_space<vmem>>, vector<8x288xf32>,
    %c0_28 = arith.constant 0 : index
    %c0_29 = arith.constant 0 : index
    %27 = vector.load %arg2[%c0_28, %c0_29] : memref<4x72xbf16, #tpu.memory_space<vmem>>, vector<4x72xbf16>
    %c0_30 = arith.constant 0 : index
    %c0_31 = arith.constant 0 : index
    %28 = vector.load %arg6[%c0_30, %c0_31] : memref<72x288xf32, #tpu.memory_space<vmem>>, vector<72x288xf32>
    %29 = arith.truncf %28 : vector<72x288xf32> to vector<72x288xbf16>
    %cst = arith.constant dense<0.000000e+00> : vector<4x288xf32>
    %30 = tpu.matmul %27, %29, %cst {dimension_numbers = #tpu.dot_dimension_numbers<[1], [0], [0], [1], [0, 0, 1, 1], [], []>} : vector<4x72xbf16>, vector<72x288xbf16>, vector<4x288xf32> -> vector<4x288xf32>
    %c0_32 = arith.constant 0 : index
    %c0_33 = arith.constant 0 : index
    %31 = vector.load %arg3[%c0_32, %c0_33] : memref<4x1xf32, #tpu.memory_space<vmem>>, vector<4x1xf32>
    %32 = vector.broadcast %31 : vector<4x1xf32> to vector<4x288xf32>
    %33 = arith.addf %30, %32 : vector<4x288xf32>
    %c0_34 = arith.constant 0 : index
    %c0_35 = arith.constant 0 : index
    %34 = vector.load %arg4[%c0_34, %c0_35] : memref<1x288xf32, #tpu.memory_space<vmem>>, vector<1x288xf32>
    %35 = vector.broadcast %34 : vector<1x288xf32> to vector<4x288xf32>
    %36 = arith.mulf %33, %35 : vector<4x288xf32>
    %cst_36 = arith.constant dense<0.000000e+00> : vector<4xf32>
    %37 = vector.multi_reduction <add>, %36, %cst_36 [1] : vector<4x288xf32> to vector<4xf32>
    %38 = vector.shape_cast %37 : vector<4xf32> to vector<4x1xf32>
    %39 = arith.mulf %36, %36 : vector<4x288xf32>
    %cst_37 = arith.constant dense<0.000000e+00> : vector<4xf32>
    %40 = vector.multi_reduction <add>, %39, %cst_37 [1] : vector<4x288xf32> to vector<4xf32>
    %41 = vector.shape_cast %40 : vector<4xf32> to vector<4x1xf32>
    %cst_38 = arith.constant 3.906250e-03 : f32
    %42 = vector.broadcast %cst_38 : f32 to vector<4x1xf32>
    %43 = arith.mulf %38, %42 : vector<4x1xf32>
    %cst_39 = arith.constant 3.906250e-03 : f32
    %44 = vector.broadcast %cst_39 : f32 to vector<4x1xf32>
    %45 = arith.mulf %41, %44 : vector<4x1xf32>
    %46 = arith.mulf %43, %43 : vector<4x1xf32>
    %47 = arith.subf %45, %46 : vector<4x1xf32>
    %48 = vector.broadcast %43 : vector<4x1xf32> to vector<4x288xf32>
    %49 = arith.subf %33, %48 : vector<4x288xf32>
    %cst_40 = arith.constant 9.99999974E-6 : f32
    %50 = vector.broadcast %cst_40 : f32 to vector<4x1xf32>
    %51 = arith.addf %47, %50 : vector<4x1xf32>
    %52 = math.rsqrt %51 : vector<4x1xf32>
    %53 = vector.broadcast %52 : vector<4x1xf32> to vector<4x288xf32>
    %54 = arith.mulf %49, %53 : vector<4x288xf32>
    %cst_41 = arith.constant 0.000000e+00 : f32
    %55 = vector.broadcast %cst_41 : f32 to vector<4x288xf32>
    %56 = arith.maximumf %54, %55 : vector<4x288xf32>
    %c0_42 = arith.constant 0 : index
    %c0_43 = arith.constant 0 : index
    %c0_44 = arith.constant 0 : index
    %57 = vector.load %arg5[%c0_42, %c0_43, %c0_44] : memref<1x4x288xf32, #tpu.memory_space<vmem>>, vector<1x4x288xf32>
    %58 = vector.shape_cast %57 : vector<1x4x288xf32> to vector<4x288xf32>
    %59 = vector.shape_cast %56 : vector<4x288xf32> to vector<1x4x288xf32>
    tpu.vector_store %arg5[%c0_42, %c0_43, %c0_44], %59 {strides = array<i32>} : memref<1x4x288xf32, #tpu.memory_space<vmem>>, vector<1x4x288xf32>,
    return
  }
  func.func @transform_0(%arg0: i32) -> (i32, i32, i32) {
    %c0_i32 = arith.constant 0 : i32
    %c0_i32_0 = arith.constant 0 : i32
    %c0_i32_1 = arith.constant 0 : i32
    return %arg0, %c0_i32, %c0_i32_0 : i32, i32, i32
  }
  func.func @transform_1(%arg0: i32) -> (i32, i32) {
    %c0_i32 = arith.constant 0 : i32
    %c0_i32_0 = arith.constant 0 : i32
    %c0_i32_1 = arith.constant 0 : i32
    return %c0_i32, %c0_i32_0 : i32, i32
  }
  func.func @transform_2(%arg0: i32) -> (i32, i32) {
    %c0_i32 = arith.constant 0 : i32
    %c0_i32_0 = arith.constant 0 : i32
    %c0_i32_1 = arith.constant 0 : i32
    return %c0_i32, %c0_i32_0 : i32, i32
  }
  func.func @transform_3(%arg0: i32) -> (i32, i32) {
    %c0_i32 = arith.constant 0 : i32
    %c0_i32_0 = arith.constant 0 : i32
    %c0_i32_1 = arith.constant 0 : i32
    return %c0_i32, %c0_i32_0 : i32, i32
  }
  func.func @transform_4(%arg0: i32) -> (i32, i32, i32) {
    %c0_i32 = arith.constant 0 : i32
    %c0_i32_0 = arith.constant 0 : i32
    %c0_i32_1 = arith.constant 0 : i32
    return %arg0, %c0_i32, %c0_i32_0 : i32, i32, i32
  }
}

</mosaic_0001>

<llo_original>
// kernel: conv_block_my_forward.1
$region0: #{conv_block_my_forward.1}
  #allocation0 [shape = 'u32[]', space=smem, size = 0x4, offset = 0x4, fixed_abs, tag = 'smem constant byte address 0x4 - core index']
  #allocation1 [shape = 'u32[144,128]{1,0:T(1,128)}', space=vmem, size = 0x12000, scoped, tag = 'internal scratch']
  #allocation2 [shape = 'f32[72,288]{1,0:T(8,128)}', space=vmem, size = 0x1b000, scoped, tag = 'scratch operand']
  %s0 = inlined_call_operand.vmem [shape: f32[2,8,326], index: 0, kind: input, shape index: {}]
  %s1 = inlined_call_operand.vmem [shape: bf16[4,72], index: 1, kind: input, shape index: {}]
  %s2 = inlined_call_operand.vmem [shape: f32[4,1], index: 2, kind: input, shape index: {}]
  %s3 = inlined_call_operand.vmem [shape: f32[1,288], index: 3, kind: input, shape index: {}]
  %s4 = inlined_call_operand.vmem [shape: f32[2,4,288], index: 4, kind: output, shape index: {}]
  %s5 = sld [smem:[#allocation0]]
  $region49: #{conv_block_my_forward.1} parent=0
    _
  %s7 = ssub.s32 1, %s5
  %s8 = scalar_select 0, %s7, %s5
  loop: start=0, step=1, limit=4
  $region2: #{conv_block_my_forward.1} parent=0 // loop_pre_header
    _
  $region3: #{conv_block_my_forward.1} parent=0 // loop_header
    %s10 = sphi 0, %s14
    %p11 = scmp.ge.s32.totalorder %s10, 4
    %s20 = sphi 0, %s22
    %s23 = sphi 0, %s20
    %s24 = sphi 0, %s23
    %s40 = sphi 0, %s24
    %s44 = sphi 0, %s44
    %s46 = sphi 0, %s44
    %s47 = sphi 0, %s46
    %s61 = sphi 0, %s47
    %s65 = sphi 0, %s65
    %s67 = sphi 0, %s65
    %s68 = sphi 0, %s67
    %s82 = sphi 0, %s68
    %s86 = sphi 0, %s86
    %s88 = sphi 0, %s86
    %s89 = sphi 0, %s88
    %s103 = sphi 0, %s89
    %s109 = sphi 0, %s111
    %s112 = sphi 0, %s109
    %s113 = sphi 0, %s112
    %s129 = sphi 0, %s113
  $region4: #{conv_block_my_forward.1} parent=0 // loop_header_branch
    %13 = sbr.rel (%p11) target = $region8
  $region5: #{conv_block_my_forward.1} parent=0 // loop_body
    %s15 = ssub.s32 %s10, 1
    %s16 = ssub.s32 %s10, 2
    %s17 = sadd.s32 %s10, 1
    %s18 = ssub.s32 %s10, %s17
    %p19 = scmp.eq.s32.totalorder %s18, 0
    %s21 = sadd.s32 %s20, 1
    %s22 = scalar_select %p19, %s20, %s21
    %p25 = pneg %p19
    %p26 = scmp.eq.s32.totalorder %s10, 1
    %p27 = por %p25, %p26
    %p28 = scmp.ne.s32.totalorder %s20, %s23
    %p29 = scmp.eq.s32.totalorder %s10, 0
    %p30 = por %p28, %p29
    %p31 = scmp.ne.s32.totalorder %s20, %s23
    %p32 = scmp.eq.s32.totalorder %s15, 1
    %p33 = por %p31, %p32
    %p34 = scmp.ne.s32.totalorder %s23, %s24
    %p35 = scmp.eq.s32.totalorder %s15, 0
    %p36 = por %p34, %p35
    %p37 = scmp.ne.s32.totalorder %s23, %s24
    %p38 = scmp.eq.s32.totalorder %s16, 1
    %p39 = por %p37, %p38
    %p41 = scmp.ne.s32.totalorder %s24, %s40
    %p42 = scmp.eq.s32.totalorder %s16, 0
    %p43 = por %p41, %p42
    %s45 = sadd.s32 %s44, 1
    %p48 = scmp.eq.s32.totalorder %s10, 1
    %p49 = scmp.ne.s32.totalorder %s44, %s46
    %p50 = scmp.eq.s32.totalorder %s10, 0
    %p51 = por %p49, %p50
    %p52 = scmp.ne.s32.totalorder %s44, %s46
    %p53 = scmp.eq.s32.totalorder %s15, 1
    %p54 = por %p52, %p53
    %p55 = scmp.ne.s32.totalorder %s46, %s47
    %p56 = scmp.eq.s32.totalorder %s15, 0
    %p57 = por %p55, %p56
    %p58 = scmp.ne.s32.totalorder %s46, %s47
    %p59 = scmp.eq.s32.totalorder %s16, 1
    %p60 = por %p58, %p59
    %p62 = scmp.ne.s32.totalorder %s47, %s61
    %p63 = scmp.eq.s32.totalorder %s16, 0
    %p64 = por %p62, %p63
    %s66 = sadd.s32 %s65, 1
    %p69 = scmp.eq.s32.totalorder %s10, 1
    %p70 = scmp.ne.s32.totalorder %s65, %s67
    %p71 = scmp.eq.s32.totalorder %s10, 0
    %p72 = por %p70, %p71
    %p73 = scmp.ne.s32.totalorder %s65, %s67
    %p74 = scmp.eq.s32.totalorder %s15, 1
    %p75 = por %p73, %p74
    %p76 = scmp.ne.s32.totalorder %s67, %s68
    %p77 = scmp.eq.s32.totalorder %s15, 0
    %p78 = por %p76, %p77
    %p79 = scmp.ne.s32.totalorder %s67, %s68
    %p80 = scmp.eq.s32.totalorder %s16, 1
    %p81 = por %p79, %p80
    %p83 = scmp.ne.s32.totalorder %s68, %s82
    %p84 = scmp.eq.s32.totalorder %s16, 0
    %p85 = por %p83, %p84
    %s87 = sadd.s32 %s86, 1
    %p90 = scmp.eq.s32.totalorder %s10, 1
    %p91 = scmp.ne.s32.totalorder %s86, %s88
    %p92 = scmp.eq.s32.totalorder %s10, 0
    %p93 = por %p91, %p92
    %p94 = scmp.ne.s32.totalorder %s86, %s88
    %p95 = scmp.eq.s32.totalorder %s15, 1
    %p96 = por %p94, %p95
    %p97 = scmp.ne.s32.totalorder %s88, %s89
    %p98 = scmp.eq.s32.totalorder %s15, 0
    %p99 = por %p97, %p98
    %p100 = scmp.ne.s32.totalorder %s88, %s89
    %p101 = scmp.eq.s32.totalorder %s16, 1
    %p102 = por %p100, %p101
    %p104 = scmp.ne.s32.totalorder %s89, %s103
    %p105 = scmp.eq.s32.totalorder %s16, 0
    %p106 = por %p104, %p105
    %s107 = ssub.s32 %s10, %s17
    %p108 = scmp.eq.s32.totalorder %s107, 0
    %s110 = sadd.s32 %s109, 1
    %s111 = scalar_select %p108, %s109, %s110
    %p114 = pneg %p108
    %p115 = scmp.eq.s32.totalorder %s10, 1
    %p116 = por %p114, %p115
    %p117 = scmp.ne.s32.totalorder %s109, %s112
    %p118 = scmp.eq.s32.totalorder %s10, 0
    %p119 = por %p117, %p118
    %p120 = scmp.ne.s32.totalorder %s109, %s112
    %p121 = scmp.eq.s32.totalorder %s15, 1
    %p122 = por %p120, %p121
    %p123 = scmp.ne.s32.totalorder %s112, %s113
    %p124 = scmp.eq.s32.totalorder %s15, 0
    %p125 = por %p123, %p124
    %p126 = scmp.ne.s32.totalorder %s112, %s113
    %p127 = scmp.eq.s32.totalorder %s16, 1
    %p128 = por %p126, %p127
    %p130 = scmp.ne.s32.totalorder %s113, %s129
    %p131 = scmp.eq.s32.totalorder %s16, 0
    %p132 = por %p130, %p131
    %p133 = scmp.le.s32.totalorder 1, %s10
    %p134 = scmp.lt.s32.totalorder %s10, 3
    %p135 = pnand %p133, %p134
    %p136 = pneg %p135
    // Predicated region
    $region9: #{conv_block_my_forward.1} parent=5 // pred_check
      _
    $region10: #{conv_block_my_forward.1} parent=5 // pred_check_branch
      %138 = sbr.rel (%p135) target = $region12
    $region11: #{conv_block_my_forward.1} parent=5 // pred_region
      %s139 = ssub.s32 %s10, 1
      // Predicated region
      $region13: #{conv_block_my_forward.1} parent=11 // pred_check
        %p140 = pneg %p57
      $region14: #{conv_block_my_forward.1} parent=11 // pred_check_branch
        %142 = sbr.rel (%p140) target = $region16
      $region15: #{conv_block_my_forward.1} parent=11 // pred_region
        _
      $region16: #{conv_block_my_forward.1} parent=11 // pred_fallthru
        _
      // Predicated region
      $region17: #{conv_block_my_forward.1} parent=11 // pred_check
        %p143 = pneg %p78
      $region18: #{conv_block_my_forward.1} parent=11 // pred_check_branch
        %145 = sbr.rel (%p143) target = $region20
      $region19: #{conv_block_my_forward.1} parent=11 // pred_region
        _
      $region20: #{conv_block_my_forward.1} parent=11 // pred_fallthru
        _
      // Predicated region
      $region21: #{conv_block_my_forward.1} parent=11 // pred_check
        %p146 = pneg %p99
      $region22: #{conv_block_my_forward.1} parent=11 // pred_check_branch
        %148 = sbr.rel (%p146) target = $region24
      $region23: #{conv_block_my_forward.1} parent=11 // pred_region
        _
      $region24: #{conv_block_my_forward.1} parent=11 // pred_fallthru
        _
    $region12: #{conv_block_my_forward.1} parent=5 // pred_fallthru
      _
    %p149 = scmp.lt.s32.totalorder %s10, 2
    // Predicated region
    $region25: #{conv_block_my_forward.1} parent=5 // pred_check
      %p150 = pneg %p149
    $region26: #{conv_block_my_forward.1} parent=5 // pred_check_branch
      %152 = sbr.rel (%p150) target = $region28
    $region27: #{conv_block_my_forward.1} parent=5 // pred_region
      // Predicated region
      $region29: #{conv_block_my_forward.1} parent=27 // pred_check
        %p153 = pneg %p30
      $region30: #{conv_block_my_forward.1} parent=27 // pred_check_branch
        %155 = sbr.rel (%p153) target = $region32
      $region31: #{conv_block_my_forward.1} parent=27 // pred_region
        %p156 = scmp.lt.s32.totalorder %s10, 1
        %s157 = scalar_select %p156, %s10, 1
        %s158 = smul.addr %s157, 3
        %s159 = smul.addr %s158, 8
        %s160 = scalar_lea.vmem %s0, %s159
      $region32: #{conv_block_my_forward.1} parent=27 // pred_fallthru
        _
    $region28: #{conv_block_my_forward.1} parent=5 // pred_fallthru
      _
    %p161 = scmp.le.s32.totalorder 1, %s10
    %p162 = scmp.lt.s32.totalorder %s10, 3
    %p163 = pnand %p161, %p162
    %p164 = pneg %p163
    // Predicated region
    $region33: #{conv_block_my_forward.1} parent=5 // pred_check
      _
    $region34: #{conv_block_my_forward.1} parent=5 // pred_check_branch
      %166 = sbr.rel (%p163) target = $region36
    $region35: #{conv_block_my_forward.1} parent=5 // pred_region
      %s167 = ssub.s32 %s10, 1
      %p168 = scmp.lt.s32.totalorder %s15, 1
      %s169 = scalar_select %p168, %s15, 1
      %s170 = smul.addr %s169, 3
      %s171 = smul.addr %s170, 8
      %s172 = scalar_lea.vmem %s0, %s171
      %p173 = pneg %p36
      %p174 = pneg %p33
      %p175 = pneg %p57
      %p176 = pneg %p54
      %p177 = pneg %p78
      %p178 = pneg %p75
      %p179 = pneg %p99
      %p180 = pneg %p96
      %p181 = pneg %p125
      %p182 = pneg %p122
      %p183 = scmp.lt.s32.totalorder %s15, 1
      %s184 = scalar_select %p183, %s15, 1
      %s185 = smul.addr %s184, 3
      %s186 = smul.addr %s185, 4
      %s187 = scalar_lea.vmem %s4, %s186
      %p188 = scmp.lt.s32.totalorder %s15, 1
      %s189 = scalar_select %p188, %s15, 1
      %s190 = smul.addr %s189, 3
      %s191 = smul.addr %s190, 8
      %s192 = scalar_lea.vmem %s0, %s191
      %p193 = scmp.lt.s32.totalorder %s15, 1
      %s194 = scalar_select %p193, %s15, 1
      %s195 = smul.addr %s194, 3
      %s196 = smul.addr %s195, 4
      %s197 = scalar_lea.vmem %s4, %s196
      %v199 = vld [vmem:[%s192] sm:$0xff]
      %v200 = vld [vmem:[%s192 + $0x8] sm:$0xff]
      %v201 = vld [vmem:[%s192 + $0x10] sm:$0xff]
      %202 = vst [vmem:[#allocation2] sm:$0xff] %v199
      %203 = vst [vmem:[#allocation2 + $0x8] sm:$0xff] %v200
      %vm204 = vcmask 261120
      %205 = vst.msk [vmem:[#allocation2 + $0x10] sm:$0xff] %vm204, %v201
      %v206 = vld [vmem:[%s192] sm:$0xff]
      %v207 = vld [vmem:[%s192 + $0x8] sm:$0xff]
      %v208 = vld [vmem:[%s192 + $0x10] sm:$0xff]
      %212 = vrot.lane.b32.xlu0 %v206, 127
      %v213 = vpop.permute.xlu0 %212
      %214 = vrot.lane.b32.xlu0 %v207, 127
      %v215 = vpop.permute.xlu0 %214
      %216 = vrot.lane.b32.xlu0 %v208, 127
      %v217 = vpop.permute.xlu0 %216
      %vm218 = vcmask 1039360
      %v219 = vsel %vm218, %v213, %v215
      %v220 = vsel %vm218, %v215, %v217
      %224 = vst [vmem:[#allocation2 + $0x18] sm:$0xff] %v219
      %225 = vst [vmem:[#allocation2 + $0x20] sm:$0xff] %v220
      %226 = vst.msk [vmem:[#allocation2 + $0x28] sm:$0xff] %vm204, %v217
      %v227 = vld [vmem:[%s192] sm:$0xff]
      %v228 = vld [vmem:[%s192 + $0x8] sm:$0xff]
      %v229 = vld [vmem:[%s192 + $0x10] sm:$0xff]
      %233 = vrot.lane.b32.xlu0 %v227, 126
      %v234 = vpop.permute.xlu0 %233
      %235 = vrot.lane.b32.xlu0 %v228, 126
      %v236 = vpop.permute.xlu0 %235
      %237 = vrot.lane.b32.xlu0 %v229, 126
      %v238 = vpop.permute.xlu0 %237
      %vm239 = vcmask 1031168
      %v240 = vsel %vm239, %v234, %v236
      %v241 = vsel %vm239, %v236, %v238
      %245 = vst [vmem:[#allocation2 + $0x30] sm:$0xff] %v240
      %246 = vst [vmem:[#allocation2 + $0x38] sm:$0xff] %v241
      %247 = vst.msk [vmem:[#allocation2 + $0x40] sm:$0xff] %vm204, %v238
      %v248 = vld [vmem:[%s192] sm:$0xff]
      %v249 = vld [vmem:[%s192 + $0x8] sm:$0xff]
      %v250 = vld [vmem:[%s192 + $0x10] sm:$0xff]
      %254 = vrot.lane.b32.xlu0 %v248, 110
      %v255 = vpop.permute.xlu0 %254
      %256 = vrot.lane.b32.xlu0 %v249, 110
      %v257 = vpop.permute.xlu0 %256
      %258 = vrot.lane.b32.xlu0 %v250, 110
      %v259 = vpop.permute.xlu0 %258
      %vm260 = vcmask 900096
      %v261 = vsel %vm260, %v255, %v257
      %v262 = vsel %vm260, %v257, %v259
      %266 = vst [vmem:[#allocation2 + $0x48] sm:$0xff] %v261
      %267 = vst [vmem:[#allocation2 + $0x50] sm:$0xff] %v262
      %268 = vst.msk [vmem:[#allocation2 + $0x58] sm:$0xff] %vm204, %v259
      %v269 = vld [vmem:[%s192] sm:$0xff]
      %v270 = vld [vmem:[%s192 + $0x8] sm:$0xff]
      %v271 = vld [vmem:[%s192 + $0x10] sm:$0xff]
      %275 = vrot.lane.b32.xlu0 %v269, 109
      %v276 = vpop.permute.xlu0 %275
      %277 = vrot.lane.b32.xlu0 %v270, 109
      %v278 = vpop.permute.xlu0 %277
      %279 = vrot.lane.b32.xlu0 %v271, 109
      %v280 = vpop.permute.xlu0 %279
      %vm281 = vcmask 891904
      %v282 = vsel %vm281, %v276, %v278
      %v283 = vsel %vm281, %v278, %v280
      %287 = vst [vmem:[#allocation2 + $0x60] sm:$0xff] %v282
      %288 = vst [vmem:[#allocation2 + $0x68] sm:$0xff] %v283
      %289 = vst.msk [vmem:[#allocation2 + $0x70] sm:$0xff] %vm204, %v280
      %v290 = vld [vmem:[%s192] sm:$0xff]
      %v291 = vld [vmem:[%s192 + $0x8] sm:$0xff]
      %v292 = vld [vmem:[%s192 + $0x10] sm:$0xff]
      %296 = vrot.lane.b32.xlu0 %v290, 108
      %v297 = vpop.permute.xlu0 %296
      %298 = vrot.lane.b32.xlu0 %v291, 108
      %v299 = vpop.permute.xlu0 %298
      %300 = vrot.lane.b32.xlu0 %v292, 108
      %v301 = vpop.permute.xlu0 %300
      %vm302 = vcmask 883712
      %v303 = vsel %vm302, %v297, %v299
      %v304 = vsel %vm302, %v299, %v301
      %308 = vst [vmem:[#allocation2 + $0x78] sm:$0xff] %v303
      %309 = vst [vmem:[#allocation2 + $0x80] sm:$0xff] %v304
      %310 = vst.msk [vmem:[#allocation2 + $0x88] sm:$0xff] %vm204, %v301
      %v311 = vld [vmem:[%s192] sm:$0xff]
      %v312 = vld [vmem:[%s192 + $0x8] sm:$0xff]
      %v313 = vld [vmem:[%s192 + $0x10] sm:$0xff]
      %317 = vrot.lane.b32.xlu0 %v311, 92
      %v318 = vpop.permute.xlu0 %317
      %319 = vrot.lane.b32.xlu0 %v312, 92
      %v320 = vpop.permute.xlu0 %319
      %321 = vrot.lane.b32.xlu0 %v313, 92
      %v322 = vpop.permute.xlu0 %321
      %vm323 = vcmask 752640
      %v324 = vsel %vm323, %v318, %v320
      %v325 = vsel %vm323, %v320, %v322
      %329 = vst [vmem:[#allocation2 + $0x90] sm:$0xff] %v324
      %330 = vst [vmem:[#allocation2 + $0x98] sm:$0xff] %v325
      %331 = vst.msk [vmem:[#allocation2 + $0xa0] sm:$0xff] %vm204, %v322
      %v332 = vld [vmem:[%s192] sm:$0xff]
      %v333 = vld [vmem:[%s192 + $0x8] sm:$0xff]
      %v334 = vld [vmem:[%s192 + $0x10] sm:$0xff]
      %338 = vrot.lane.b32.xlu0 %v332, 91
      %v339 = vpop.permute.xlu0 %338
      %340 = vrot.lane.b32.xlu0 %v333, 91
      %v341 = vpop.permute.xlu0 %340
      %342 = vrot.lane.b32.xlu0 %v334, 91
      %v343 = vpop.permute.xlu0 %342
      %vm344 = vcmask 744448
      %v345 = vsel %vm344, %v339, %v341
      %v346 = vsel %vm344, %v341, %v343
      %350 = vst [vmem:[#allocation2 + $0xa8] sm:$0xff] %v345
      %351 = vst [vmem:[#allocation2 + $0xb0] sm:$0xff] %v346
      %352 = vst.msk [vmem:[#allocation2 + $0xb8] sm:$0xff] %vm204, %v343
      %v353 = vld [vmem:[%s192] sm:$0xff]
      %v354 = vld [vmem:[%s192 + $0x8] sm:$0xff]
      %v355 = vld [vmem:[%s192 + $0x10] sm:$0xff]
      %359 = vrot.lane.b32.xlu0 %v353, 90
      %v360 = vpop.permute.xlu0 %359
      %361 = vrot.lane.b32.xlu0 %v354, 90
      %v362 = vpop.permute.xlu0 %361
      %363 = vrot.lane.b32.xlu0 %v355, 90
      %v364 = vpop.permute.xlu0 %363
      %vm365 = vcmask 736256
      %v366 = vsel %vm365, %v360, %v362
      %v367 = vsel %vm365, %v362, %v364
      %371 = vst [vmem:[#allocation2 + $0xc0] sm:$0xff] %v366
      %372 = vst [vmem:[#allocation2 + $0xc8] sm:$0xff] %v367
      %373 = vst.msk [vmem:[#allocation2 + $0xd0] sm:$0xff] %vm204, %v364
      %v374 = vld [vmem:[%s1] sm:$0x3]
      %v375 = vld [vmem:[#allocation2] sm:$0xff]
      %v376 = vld [vmem:[#allocation2 + $0x8] sm:$0xff]
      %v377 = vld [vmem:[#allocation2 + $0x10] sm:$0xff]
      %v378 = vld [vmem:[#allocation2 + $0x18] sm:$0xff]
      %v379 = vld [vmem:[#allocation2 + $0x20] sm:$0xff]
      %v380 = vld [vmem:[#allocation2 + $0x28] sm:$0xff]
      %v381 = vld [vmem:[#allocation2 + $0x30] sm:$0xff]
      %v382 = vld [vmem:[#allocation2 + $0x38] sm:$0xff]
      %v383 = vld [vmem:[#allocation2 + $0x40] sm:$0xff]
      %v384 = vld [vmem:[#allocation2 + $0x48] sm:$0xff]
      %v385 = vld [vmem:[#allocation2 + $0x50] sm:$0xff]
      %v386 = vld [vmem:[#allocation2 + $0x58] sm:$0xff]
      %v387 = vld [vmem:[#allocation2 + $0x60] sm:$0xff]
      %v388 = vld [vmem:[#allocation2 + $0x68] sm:$0xff]
      %v389 = vld [vmem:[#allocation2 + $0x70] sm:$0xff]
      %v390 = vld [vmem:[#allocation2 + $0x78] sm:$0xff]
      %v391 = vld [vmem:[#allocation2 + $0x80] sm:$0xff]
      %v392 = vld [vmem:[#allocation2 + $0x88] sm:$0xff]
      %v393 = vld [vmem:[#allocation2 + $0x90] sm:$0xff]
      %v394 = vld [vmem:[#allocation2 + $0x98] sm:$0xff]
      %v395 = vld [vmem:[#allocation2 + $0xa0] sm:$0xff]
      %v396 = vld [vmem:[#allocation2 + $0xa8] sm:$0xff]
      %v397 = vld [vmem:[#allocation2 + $0xb0] sm:$0xff]
      %v398 = vld [vmem:[#allocation2 + $0xb8] sm:$0xff]
      %v399 = vld [vmem:[#allocation2 + $0xc0] sm:$0xff]
      %v400 = vld [vmem:[#allocation2 + $0xc8] sm:$0xff]
      %v401 = vld [vmem:[#allocation2 + $0xd0] sm:$0xff]
      %v402 = vpack.c.bf16 %v378, %v375
      %v403 = vpack.c.bf16 %v379, %v376
      %v404 = vpack.c.bf16 %v380, %v377
      %v405 = vpack.c.bf16 %v384, %v381
      %v406 = vpack.c.bf16 %v385, %v382
      %v407 = vpack.c.bf16 %v386, %v383
      %v408 = vpack.c.bf16 %v390, %v387
      %v409 = vpack.c.bf16 %v391, %v388
      %v410 = vpack.c.bf16 %v392, %v389
      %v411 = vpack.c.bf16 %v396, %v393
      %v412 = vpack.c.bf16 %v397, %v394
      %v413 = vpack.c.bf16 %v398, %v395
      %v414 = vpack.c.bf16 %v399, %v399
      %v415 = vpack.c.bf16 %v400, %v400
      %v416 = vpack.c.bf16 %v401, %v401
      %v417 = vld [vmem:[%s2] sm:$0xf]
      %419 = vset.pattern.permute.xlu0 0
      %420 = vperm.xlu0 %419, %v417
      %v421 = vpop.permute.xlu0 %420
      %vm423 = vcmask 588800
      %v425 = vsel %vm423, %v374, 0
      %vm427 = vcmask 1043456
      %v429 = vsel %vm427, %v414, 0
      %v432 = vsel %vm427, %v415, 0
      %v435 = vsel %vm427, %v416, 0
      %437 = vmatprep.subr.bf16.mxu0 0
      %438 = vmatpush1.bf16.msra.mxu0 0
      %439 = vmatprep.subr.bf16.mxu0 0
      %440 = vmatpush1.bf16.msra.mxu0 0
      %441 = vmatprep.subr.bf16.mxu0 0
      %442 = vmatpush1.bf16.msra.mxu0 0
      %443 = vmatprep.subr.bf16.mxu0 %v432
      %444 = vmatpush1.bf16.msra.mxu0 %v429
      %445 = vmatprep.subr.bf16.mxu0 %v412
      %446 = vmatpush1.bf16.msra.mxu0 %v411
      %447 = vmatprep.subr.bf16.mxu0 %v409
      %448 = vmatpush1.bf16.msra.mxu0 %v408
      %449 = vmatprep.subr.bf16.mxu0 %v406
      %450 = vmatpush1.bf16.msra.mxu0 %v405
      %451 = vmatprep.subr.bf16.mxu0 %v403
      %452 = vmatpush1.bf16.msra.mxu0 %v402
      %453 = vmatprep.subr.bf16.mxu0 0
      %454 = vmatpush2.bf16.msra.mxu0 0
      %455 = vmatprep.subr.bf16.mxu0 0
      %456 = vmatpush2.bf16.msra.mxu0 0
      %457 = vmatprep.subr.bf16.mxu0 0
      %458 = vmatpush2.bf16.msra.mxu0 0
      %459 = vmatprep.subr.bf16.mxu0 0
      %460 = vmatpush2.bf16.msra.mxu0 0
      %461 = vmatprep.subr.bf16.mxu0 0
      %462 = vmatpush2.bf16.msra.mxu0 0
      %463 = vmatprep.subr.bf16.mxu0 0
      %464 = vmatpush2.bf16.msra.mxu0 0
      %465 = vmatprep.subr.bf16.mxu0 0
      %466 = vmatpush2.bf16.msra.mxu0 0
      %467 = vmatprep.subr.bf16.mxu0 0
      %468 = vmatpush2.bf16.msra.mxu0 0
      %469 = vmatprep.mubr.bf16.mxu0 0
      %470 = vmatmul.mubr.bf16.gmra.mxu0 %v425
      %v471 = vpop.f32.mrf.mxu0
      %v472 = vadd.f32 %v421, %v471
      %v473 = vpop.f32.mrf.mxu0
      %v474 = vadd.f32 %v421, %v473
      %v475 = vpop.f32.mrf.mxu0
      %v476 = vpop.f32.mrf.mxu0
      %477 = vdwg.mxu0
      %478 = vmatprep.subr.bf16.mxu0 0
      %479 = vmatpush1.bf16.msra.mxu0 0
      %480 = vmatprep.subr.bf16.mxu0 0
      %481 = vmatpush1.bf16.msra.mxu0 0
      %482 = vmatprep.subr.bf16.mxu0 0
      %483 = vmatpush1.bf16.msra.mxu0 0
      %484 = vmatprep.subr.bf16.mxu0 0
      %485 = vmatpush1.bf16.msra.mxu0 %v435
      %486 = vmatprep.subr.bf16.mxu0 0
      %487 = vmatpush1.bf16.msra.mxu0 %v413
      %488 = vmatprep.subr.bf16.mxu0 0
      %489 = vmatpush1.bf16.msra.mxu0 %v410
      %490 = vmatprep.subr.bf16.mxu0 0
      %491 = vmatpush1.bf16.msra.mxu0 %v407
      %492 = vmatprep.subr.bf16.mxu0 0
      %493 = vmatpush1.bf16.msra.mxu0 %v404
      %494 = vmatprep.subr.bf16.mxu0 0
      %495 = vmatpush2.bf16.msra.mxu0 0
      %496 = vmatprep.subr.bf16.mxu0 0
      %497 = vmatpush2.bf16.msra.mxu0 0
      %498 = vmatprep.subr.bf16.mxu0 0
      %499 = vmatpush2.bf16.msra.mxu0 0
      %500 = vmatprep.subr.bf16.mxu0 0
      %501 = vmatpush2.bf16.msra.mxu0 0
      %502 = vmatprep.subr.bf16.mxu0 0
      %503 = vmatpush2.bf16.msra.mxu0 0
      %504 = vmatprep.subr.bf16.mxu0 0
      %505 = vmatpush2.bf16.msra.mxu0 0
      %506 = vmatprep.subr.bf16.mxu0 0
      %507 = vmatpush2.bf16.msra.mxu0 0
      %508 = vmatprep.subr.bf16.mxu0 0
      %509 = vmatpush2.bf16.msra.mxu0 0
      %510 = vmatprep.mubr.bf16.mxu0 0
      %511 = vmatmul.mubr.bf16.gmra.mxu0 %v425
      %v512 = vpop.f32.mrf.mxu0
      %v513 = vadd.f32 %v421, %v512
      %v514 = vpop.f32.mrf.mxu0
      %v515 = vpop.f32.mrf.mxu0
      %v516 = vpop.f32.mrf.mxu0
      %517 = vdwg.mxu0
      %v518 = vld [vmem:[%s3] sm:$0x7]
      %v520 = vlaneseq
      %v521 = vshrl.u32 %v520, 7
      %v522 = vsub.s32 0, %v521
      %v523 = vrot.slane %v518, %v522
      %v524 = vlaneseq
      %v525 = vshrl.u32 %v524, 7
      %v526 = vsub.s32 1, %v525
      %v527 = vrot.slane %v518, %v526
      %v528 = vlaneseq
      %v529 = vshrl.u32 %v528, 7
      %v530 = vsub.s32 2, %v529
      %v531 = vrot.slane %v518, %v530
      %v535 = vmul.f32 %v472, %v523
      %v536 = vmul.f32 %v474, %v527
      %v537 = vmul.f32 %v513, %v531
      %v538 = vsel %vm427, %v535, 0.0
      %v539 = vsel %vm427, %v536, 0.0
      %v540 = vadd.f32 %v538, %v539
      %vm541 = vcmask 257024
      %v542 = vsel %vm541, %v537, 0.0
      %v543 = vadd.f32 %v540, %v542
      %544 = vadd.xlane.f32.xlu0 %v543
      %v545 = vpop.xlane.xlu0 %544
      %v546 = vmul.f32 %v535, %v535
      %v547 = vmul.f32 %v536, %v536
      %v548 = vmul.f32 %v537, %v537
      %v549 = vsel %vm427, %v546, 0.0
      %v550 = vsel %vm427, %v547, 0.0
      %v551 = vadd.f32 %v549, %v550
      %v552 = vsel %vm541, %v548, 0.0
      %v553 = vadd.f32 %v551, %v552
      %554 = vadd.xlane.f32.xlu0 %v553
      %v555 = vpop.xlane.xlu0 %554
      %v556 = vmul.f32 %v545, 0.00390625
      %v557 = vmul.f32 %v555, 0.00390625
      %v558 = vmul.f32 %v556, %v556
      %v559 = vsub.f32 %v557, %v558
      %v560 = vsub.f32 %v472, %v556
      %v561 = vsub.f32 %v474, %v556
      %v562 = vsub.f32 %v513, %v556
      %v563 = vadd.f32 %v559, 1e-05
      %v564 = vrsqrt.pop %v563
      %v565 = vmul.f32 %v560, %v564
      %v566 = vmul.f32 %v561, %v564
      %v567 = vmul.f32 %v562, %v564
      %v568 = vmax.f32 %v565, 0.0
      %v569 = vmax.f32 %v566, 0.0
      %v570 = vmax.f32 %v567, 0.0
      %v573 = vcombine.low %v568, %v569
      %575 = vst [vmem:[%s197] sm:$0xff] %v573
      %576 = vst.msk [vmem:[%s197 + $0x8] sm:$0xf] %vm541, %v570
      %p577 = scmp.lt.s32.totalorder %s15, 1
      %s578 = scalar_select %p577, %s15, 1
      %s579 = smul.addr %s578, 3
      %s580 = smul.addr %s579, 4
      %s581 = scalar_lea.vmem %s4, %s580
      // Predicated region
      $region37: #{conv_block_my_forward.1} parent=35 // pred_check
        %p582 = pneg %p122
      $region38: #{conv_block_my_forward.1} parent=35 // pred_check_branch
        %584 = sbr.rel (%p582) target = $region40
      $region39: #{conv_block_my_forward.1} parent=35 // pred_region
        _
      $region40: #{conv_block_my_forward.1} parent=35 // pred_fallthru
        _
    $region36: #{conv_block_my_forward.1} parent=5 // pred_fallthru
      _
    %p585 = scmp.le.s32.totalorder 2, %s10
    // Predicated region
    $region41: #{conv_block_my_forward.1} parent=5 // pred_check
      %p586 = pneg %p585
    $region42: #{conv_block_my_forward.1} parent=5 // pred_check_branch
      %588 = sbr.rel (%p586) target = $region44
    $region43: #{conv_block_my_forward.1} parent=5 // pred_region
      %s589 = ssub.s32 %s10, 2
      // Predicated region
      $region45: #{conv_block_my_forward.1} parent=43 // pred_check
        %p590 = pneg %p128
      $region46: #{conv_block_my_forward.1} parent=43 // pred_check_branch
        %592 = sbr.rel (%p590) target = $region48
      $region47: #{conv_block_my_forward.1} parent=43 // pred_region
        %p593 = scmp.lt.s32.totalorder %s16, 1
        %s594 = scalar_select %p593, %s16, 1
        %s595 = smul.addr %s594, 3
        %s596 = smul.addr %s595, 4
        %s597 = scalar_lea.vmem %s4, %s596
      $region48: #{conv_block_my_forward.1} parent=43 // pred_fallthru
        _
    $region44: #{conv_block_my_forward.1} parent=5 // pred_fallthru
      _
  $region6: #{conv_block_my_forward.1} parent=0 // loop_footer
    %s14 = sadd.s32 1, %s10
  $region7: #{conv_block_my_forward.1} parent=0 // loop_footer_branch
    %9 = sbr.rel target = $region3
  $region8: #{conv_block_my_forward.1} parent=0 // loop_exit
    _

</llo_original>
